<compile_context>
chip_gen: v7x
topology: tpu7x:2x2x1
jax: 0.10.0
libtpu: 0.0.40
codegen_flags: <defaults>
</compile_context>

<pallas_src>
import functools

import jax
import jax.numpy as jnp
from jax import lax
from jax.experimental import pallas as pl
from jax.experimental.pallas import tpu as pltpu


_SUB_ROWS = 128   # in-kernel row sub-block: (128, 256) f32 intermediate ~32 vregs


# ----------------------------- Pallas kernel --------------------------------

def _graphconv_kernel(deg_ref, x_ref, w_ref, lanedeg_ref, sel_ref, out_ref, *,
                      sub_rows):
    # deg_ref    : (TR, 1)       int32  -- atom degree per row (-1 for padding)
    # x_ref      : (TR, K)       bf16   -- packed [atom | bond | 1 | 0] features
    # w_ref      : (K, N_pad)    bf16   -- fused per-degree weights + bias row
    # lanedeg_ref: (1, N_pad)    int32  -- lane -> degree map (-2 in pad lanes)
    # sel_ref    : (N_pad, C)    bf16   -- folds degree chunks onto C out lanes
    # out_ref    : (TR, C)       f32/bf16
    n_sub = x_ref.shape[0] // sub_rows

    def body(s, carry):
        r0 = pl.multiple_of(s * sub_rows, sub_rows)
        x = x_ref[pl.ds(r0, sub_rows), :]            # (SUB, K)  bf16
        deg = deg_ref[pl.ds(r0, sub_rows), :]        # (SUB, 1)  int32

        # One fused matmul over all degrees; bias is included via the ones
        # column of x and the bias row of w (f32 accumulation).
        h = jnp.dot(x, w_ref[...], preferred_element_type=jnp.float32)

        # Degree selection: single broadcast compare, no bias/ReLU here.
        mask = deg == lanedeg_ref[...]               # (SUB, N_pad) bool
        g = jnp.where(mask, h, 0.0).astype(jnp.bfloat16)

        # Fold the D*C masked chunks back onto C output lanes (bf16 MXU),
        # then bias is already inside -> ReLU once on the (SUB, C) result.
        res = jnp.dot(g, sel_ref[...], preferred_element_type=jnp.float32)
        out_ref[pl.ds(r0, sub_rows), :] = jnp.maximum(res, 0.0).astype(out_ref.dtype)
        return carry

    lax.fori_loop(0, n_sub, body, 0)


def _round_up(x, m):
    return (x + m - 1) // m * m


def graphconv_pallas(features, degrees, W, b, *, row_tile=2048,
                     out_dtype=jnp.float32):
    """features: (R, Fin) f32 summed atom|bond features, degrees: (R, 1) int32,
    W: (max_degree, Fin, conv_width) f32, b: (max_degree, 1, conv_width) f32.
    Returns (R, conv_width) out_dtype."""
    R, Fin = features.shape
    D, input_dim, C = W.shape
    assert input_dim == Fin

    N = D * C
    N_pad = _round_up(N, 128)          # lane-align fused matmul output (192 -> 256)
    K_pad = _round_up(Fin + 1, 16)     # +1 ones column carries the bias

    # Packed weight: rows [0:Fin] = per-degree weights laid out degree-major on
    # lanes, row Fin = per-degree bias, remaining rows zero; bf16 operands.
    W_fused = jnp.transpose(W, (1, 0, 2)).reshape(Fin, N)
    bias_row = b.reshape(1, N)
    W_packed = jnp.concatenate(
        [W_fused, bias_row, jnp.zeros((K_pad - Fin - 1, N), W.dtype)], axis=0)
    W_packed = jnp.pad(W_packed, ((0, 0), (0, N_pad - N))).astype(jnp.bfloat16)

    # Lane -> degree map; pad lanes get -2 so they never match a real degree
    # (padding rows carry degree -1; degree == max_degree rows match nothing,
    #  producing zeros exactly like the PyTorch range(max_degree) loop).
    lane_idx = jnp.arange(N_pad, dtype=jnp.int32)
    lane_deg = jnp.where(lane_idx < N, lane_idx // C, -2).reshape(1, N_pad)

    # Selection matrix folding lane j = d*C + c onto output channel c (0/1 ->
    # exact in bf16).
    sel = jnp.zeros((N_pad, C), jnp.float32)
    sel = sel.at[jnp.arange(N), jnp.arange(N) % C].set(1.0)
    sel = sel.astype(jnp.bfloat16)

    # Packed input: [features | 1 | 0-pad] in bf16 (single lane-friendly K=32
    # stream; the ones column folds the bias into the matmul).
    x = jnp.concatenate(
        [features, jnp.ones((R, 1), features.dtype),
         jnp.zeros((R, K_pad - Fin - 1), features.dtype)],
        axis=-1).astype(jnp.bfloat16)

    # Row tile: large to amortize per-grid-step overhead, forced to a multiple
    # of the in-kernel sub-block, clamped so tiny inputs don't over-pad.
    row_tile = min(_round_up(row_tile, _SUB_ROWS), _round_up(R, _SUB_ROWS))
    row_tile = max(_SUB_ROWS, row_tile)
    R_pad = _round_up(R, row_tile)
    if R_pad != R:
        x = jnp.pad(x, ((0, R_pad - R), (0, 0)))
        degrees = jnp.pad(degrees, ((0, R_pad - R), (0, 0)), constant_values=-1)

    grid = (R_pad // row_tile,)
    kernel = functools.partial(_graphconv_kernel, sub_rows=_SUB_ROWS)

    out = pl.pallas_call(
        kernel,
        out_shape=jax.ShapeDtypeStruct((R_pad, C), out_dtype),
        grid_spec=pltpu.PrefetchScalarGridSpec(
            num_scalar_prefetch=0,
            grid=grid,
            in_specs=[
                pl.BlockSpec((row_tile, 1), lambda i: (i, 0)),      # degrees
                pl.BlockSpec((row_tile, K_pad), lambda i: (i, 0)),  # packed feats
                pl.BlockSpec((K_pad, N_pad), lambda i: (0, 0)),     # fused W (resident)
                pl.BlockSpec((1, N_pad), lambda i: (0, 0)),         # lane->degree
                pl.BlockSpec((N_pad, C), lambda i: (0, 0)),         # selection
            ],
            out_specs=pl.BlockSpec((row_tile, C), lambda i: (i, 0)),
        ),
        compiler_params=pltpu.CompilerParams(
            dimension_semantics=("parallel",)),
    )(degrees, x, W_packed, lane_deg, sel)
    return out[:R]


# ------------------------------- JAX glue ------------------------------------

def lookup_neighbors(atoms, edges, include_self=True):
    """atoms: (B, A, F), edges: (B, A, D) int32 with -1 for missing neighbors.
    Returns (B, A, D[+1], F) neighbor atom features (missing -> zeros)."""
    B, A, F = atoms.shape
    masked_atoms = jnp.concatenate(
        [jnp.zeros((B, 1, F), atoms.dtype), atoms], axis=1)      # index 0 = zeros
    idx = edges + 1                                               # (B, A, D)
    gathered = masked_atoms[jnp.arange(B)[:, None, None], idx]    # (B, A, D, F)
    if include_self:
        gathered = jnp.concatenate([atoms[:, :, None, :], gathered], axis=2)
    return gathered


def graph_conv_forward(atoms, bonds, edges, W, b, *, row_tile=2048,
                       out_dtype=jnp.float32):
    """Full GraphConv forward. atoms (B,A,Fa), bonds (B,A,D,Fb), edges (B,A,D)."""
    B, A, Fa = atoms.shape
    Fb = bonds.shape[-1]
    conv_width = W.shape[-1]

    atom_degrees = (edges != -1).sum(-1, keepdims=True).astype(jnp.int32)  # (B,A,1)

    # TODO(synk): neighbor gather (data-dependent advanced indexing) stays in XLA.
    neighbor_atom_features = lookup_neighbors(atoms, edges, include_self=True)
    summed_atom_features = neighbor_atom_features.sum(-2)         # (B, A, Fa)
    summed_bond_features = bonds.sum(-2)                          # (B, A, Fb)

    # TODO(synk): for very large B*A an MoE-style degree-sorted grouped matmul
    # (scalar-prefetch row offsets) would remove the lane expansion entirely.
    feats = jnp.concatenate(
        [summed_atom_features.reshape(B * A, Fa),
         summed_bond_features.reshape(B * A, Fb)], axis=-1)        # (R, Fa+Fb)
    deg = atom_degrees.reshape(B * A, 1)

    out_flat = graphconv_pallas(feats, deg, W, b, row_tile=row_tile,
                                out_dtype=out_dtype)
    return out_flat.reshape(B, A, conv_width)


def graph_conv_reference(atoms, bonds, edges, W, b):
    """Pure-JAX reference mirroring the PyTorch forward, with the same bf16
    quantization points as the kernel (bf16 matmul operands / bf16 bias /
    bf16 rounding of the pre-ReLU activations); accumulation in f32."""
    atom_degrees = (edges != -1).sum(-1, keepdims=True)              # (B,A,1)
    neighbor = lookup_neighbors(atoms, edges, include_self=True)
    summed = jnp.concatenate([neighbor.sum(-2), bonds.sum(-2)], axis=-1)
    summed = summed.astype(jnp.bfloat16).astype(jnp.float32)
    Wq = W.astype(jnp.bfloat16).astype(jnp.float32)
    bq = b.astype(jnp.bfloat16).astype(jnp.float32)
    new_features = None
    for d in range(W.shape[0]):
        mask = (atom_degrees == d).astype(jnp.float32)
        h = jnp.einsum("baf,fc->bac", summed, Wq[d]) + bq[d, 0]
        h = h.astype(jnp.bfloat16).astype(jnp.float32)   # fold-operand rounding
        h = jax.nn.relu(h) * mask
        new_features = h if new_features is None else new_features + h
    return new_features


# --------------------------------- main --------------------------------------

if __name__ == "__main__":
    B = 2            # samples
    A = 8            # max_atoms
    D = 6            # max_degree
    Fa = 16          # num_atom_features
    Fb = 8           # num_bond_features
    input_dim = Fa + Fb
    conv_width = 32

    key = jax.random.PRNGKey(0)
    k_atoms, k_bonds, k_edges, k_w, k_b = jax.random.split(key, 5)

    atoms = jax.random.normal(k_atoms, (B, A, Fa), dtype=jnp.float32)
    bonds = jax.random.normal(k_bonds, (B, A, D, Fb), dtype=jnp.float32)
    # edges in [-1, A): -1 marks a missing neighbor
    edges = jax.random.randint(k_edges, (B, A, D), minval=-1, maxval=A,
                               dtype=jnp.int32)

    # Per-degree Linear(input_dim -> conv_width) parameters, stacked.
    W = (jax.random.normal(k_w, (D, input_dim, conv_width), dtype=jnp.float32)
         * (1.0 / jnp.sqrt(input_dim)))
    b = (jax.random.normal(k_b, (D, 1, conv_width), dtype=jnp.float32) * 0.1)

    out = graph_conv_forward(atoms, bonds, edges, W, b)
    out = jax.block_until_ready(out)

    ref = graph_conv_reference(atoms, bonds, edges, W, b)
    assert out.shape == (B, A, conv_width)
    # bf16 fold operands / bf16 bias => ~2^-8 relative rounding on the result.
    assert jnp.allclose(out, ref, atol=1e-2, rtol=2e-2), \
        float(jnp.max(jnp.abs(out - ref)))

    print("KERNEL_OK")
</pallas_src>

<mosaic_0001>
module attributes {stable_mosaic.version = 11 : i64} {
  func.func @_graphconv_kernel(%arg0: i32, %arg1: memref<128x1xi32, #tpu.memory_space<vmem>>, %arg2: memref<128x32xbf16, #tpu.memory_space<vmem>>, %arg3: memref<32x256xbf16, #tpu.memory_space<vmem>>, %arg4: memref<1x256xi32, #tpu.memory_space<vmem>>, %arg5: memref<256x32xbf16, #tpu.memory_space<vmem>>, %arg6: memref<128x32xf32, #tpu.memory_space<vmem>>) attributes {dimension_semantics = [#tpu.dimension_semantics<parallel>], iteration_bounds = array<i64: 1>, scalar_prefetch = 0 : i64, scratch_operands = 0 : i64, tpu.core_type = #tpu.core_type<tc>, window_params = [{transform_indices = @transform_0, window_bounds = array<i64: 128, 1>}, {transform_indices = @transform_1, window_bounds = array<i64: 128, 32>}, {pipeline_mode = #tpu.pipeline_mode<synchronous>, transform_indices = @transform_2, window_bounds = array<i64: 32, 256>}, {pipeline_mode = #tpu.pipeline_mode<synchronous>, transform_indices = @transform_3, window_bounds = array<i64: 1, 256>}, {pipeline_mode = #tpu.pipeline_mode<synchronous>, transform_indices = @transform_4, window_bounds = array<i64: 256, 32>}, {transform_indices = @transform_5, window_bounds = array<i64: 128, 32>}]} {
    %c0_i32 = arith.constant 0 : i32
    %c128_i32 = arith.constant 128 : i32
    %0 = arith.muli %c0_i32, %c128_i32 : i32
    %1 = tpu.assume_multiple %0, 128 : i32
    %2 = arith.index_cast %1 : i32 to index
    %c0 = arith.constant 0 : index
    %3 = vector.load %arg2[%2, %c0] : memref<128x32xbf16, #tpu.memory_space<vmem>>, vector<128x32xbf16>
    %4 = arith.index_cast %1 : i32 to index
    %c0_0 = arith.constant 0 : index
    %5 = vector.load %arg1[%4, %c0_0] : memref<128x1xi32, #tpu.memory_space<vmem>>, vector<128x1xi32>
    %c0_1 = arith.constant 0 : index
    %c0_2 = arith.constant 0 : index
    %6 = vector.load %arg3[%c0_1, %c0_2] : memref<32x256xbf16, #tpu.memory_space<vmem>>, vector<32x256xbf16>
    %cst = arith.constant dense<0.000000e+00> : vector<128x256xf32>
    %7 = tpu.matmul %3, %6, %cst {dimension_numbers = #tpu.dot_dimension_numbers<[1], [0], [0], [1], [0, 0, 1, 1], [], []>} : vector<128x32xbf16>, vector<32x256xbf16>, vector<128x256xf32> -> vector<128x256xf32>
    %c0_3 = arith.constant 0 : index
    %c0_4 = arith.constant 0 : index
    %8 = vector.load %arg4[%c0_3, %c0_4] : memref<1x256xi32, #tpu.memory_space<vmem>>, vector<1x256xi32>
    %9 = vector.broadcast %5 : vector<128x1xi32> to vector<128x256xi32>
    %10 = vector.broadcast %8 : vector<1x256xi32> to vector<128x256xi32>
    %11 = arith.cmpi eq, %9, %10 : vector<128x256xi32>
    %cst_5 = arith.constant 0.000000e+00 : f32
    %12 = vector.broadcast %cst_5 : f32 to vector<128x256xf32>
    %13 = arith.select %11, %7, %12 : vector<128x256xi1>, vector<128x256xf32>
    %14 = arith.truncf %13 : vector<128x256xf32> to vector<128x256xbf16>
    %c0_6 = arith.constant 0 : index
    %c0_7 = arith.constant 0 : index
    %15 = vector.load %arg5[%c0_6, %c0_7] : memref<256x32xbf16, #tpu.memory_space<vmem>>, vector<256x32xbf16>
    %cst_8 = arith.constant dense<0.000000e+00> : vector<128x32xf32>
    %16 = tpu.matmul %14, %15, %cst_8 {dimension_numbers = #tpu.dot_dimension_numbers<[1], [0], [0], [1], [0, 0, 1, 1], [], []>} : vector<128x256xbf16>, vector<256x32xbf16>, vector<128x32xf32> -> vector<128x32xf32>
    %cst_9 = arith.constant 0.000000e+00 : f32
    %17 = vector.broadcast %cst_9 : f32 to vector<128x32xf32>
    %18 = arith.maximumf %16, %17 : vector<128x32xf32>
    %19 = arith.index_cast %1 : i32 to index
    %c0_10 = arith.constant 0 : index
    %20 = vector.load %arg6[%19, %c0_10] : memref<128x32xf32, #tpu.memory_space<vmem>>, vector<128x32xf32>
    tpu.vector_store %arg6[%19, %c0_10], %18 {strides = array<i32>} : memref<128x32xf32, #tpu.memory_space<vmem>>, vector<128x32xf32>,
    %c1_i32 = arith.constant 1 : i32
    return
  }
  func.func @transform_0(%arg0: i32) -> (i32, i32) {
    %c0_i32 = arith.constant 0 : i32
    %c0_i32_0 = arith.constant 0 : i32
    return %arg0, %c0_i32 : i32, i32
  }
  func.func @transform_1(%arg0: i32) -> (i32, i32) {
    %c0_i32 = arith.constant 0 : i32
    %c0_i32_0 = arith.constant 0 : i32
    return %arg0, %c0_i32 : i32, i32
  }
  func.func @transform_2(%arg0: i32) -> (i32, i32) {
    %c0_i32 = arith.constant 0 : i32
    %c0_i32_0 = arith.constant 0 : i32
    %c0_i32_1 = arith.constant 0 : i32
    return %c0_i32, %c0_i32_0 : i32, i32
  }
  func.func @transform_3(%arg0: i32) -> (i32, i32) {
    %c0_i32 = arith.constant 0 : i32
    %c0_i32_0 = arith.constant 0 : i32
    %c0_i32_1 = arith.constant 0 : i32
    return %c0_i32, %c0_i32_0 : i32, i32
  }
  func.func @transform_4(%arg0: i32) -> (i32, i32) {
    %c0_i32 = arith.constant 0 : i32
    %c0_i32_0 = arith.constant 0 : i32
    %c0_i32_1 = arith.constant 0 : i32
    return %c0_i32, %c0_i32_0 : i32, i32
  }
  func.func @transform_5(%arg0: i32) -> (i32, i32) {
    %c0_i32 = arith.constant 0 : i32
    %c0_i32_0 = arith.constant 0 : i32
    return %arg0, %c0_i32 : i32, i32
  }
}

</mosaic_0001>

<llo_original>
// kernel: tpu_custom_call.1
$region0: #{tpu_custom_call.1}
  #allocation0 [shape = 'u32[]', space=smem, size = 0x4, offset = 0x4, fixed_abs, tag = 'smem constant byte address 0x4 - core index']
  #allocation1 [shape = 'u32[144,128]{1,0:T(1,128)}', space=vmem, size = 0x12000, scoped, tag = 'internal scratch']
  %s0 = inlined_call_operand.vmem [shape: s32[128,1], index: 0, kind: input, shape index: {}]
  %s1 = inlined_call_operand.vmem [shape: bf16[128,32], index: 1, kind: input, shape index: {}]
  %s2 = inlined_call_operand.vmem [shape: bf16[32,256], index: 2, kind: input, shape index: {}]
  %s3 = inlined_call_operand.vmem [shape: s32[1,256], index: 3, kind: input, shape index: {}]
  %s4 = inlined_call_operand.vmem [shape: bf16[256,32], index: 4, kind: input, shape index: {}]
  %s5 = inlined_call_operand.vmem [shape: f32[128,32], index: 5, kind: output, shape index: {}]
  %s6 = sld [smem:[#allocation0]]
  $region30: #{tpu_custom_call.1} parent=0
    _
  %s8 = ssub.s32 1, %s6
  %s9 = scalar_select 0, %s8, %s6
  // Predicated region
  $region2: #{tpu_custom_call.1} parent=0 // pred_check
    _
  $region3: #{tpu_custom_call.1} parent=0 // pred_check_branch
    %11 = sbr.rel (0) target = $region5
  $region4: #{tpu_custom_call.1} parent=0 // pred_region
    _
  $region5: #{tpu_custom_call.1} parent=0 // pred_fallthru
    _
  // Predicated region
  $region6: #{tpu_custom_call.1} parent=0 // pred_check
    _
  $region7: #{tpu_custom_call.1} parent=0 // pred_check_branch
    %13 = sbr.rel (0) target = $region9
  $region8: #{tpu_custom_call.1} parent=0 // pred_region
    _
  $region9: #{tpu_custom_call.1} parent=0 // pred_fallthru
    _
  // Predicated region
  $region10: #{tpu_custom_call.1} parent=0 // pred_check
    _
  $region11: #{tpu_custom_call.1} parent=0 // pred_check_branch
    %15 = sbr.rel (0) target = $region13
  $region12: #{tpu_custom_call.1} parent=0 // pred_region
    _
  $region13: #{tpu_custom_call.1} parent=0 // pred_fallthru
    _
  // Predicated region
  $region14: #{tpu_custom_call.1} parent=0 // pred_check
    _
  $region15: #{tpu_custom_call.1} parent=0 // pred_check_branch
    %17 = sbr.rel (0) target = $region17
  $region16: #{tpu_custom_call.1} parent=0 // pred_region
    _
  $region17: #{tpu_custom_call.1} parent=0 // pred_fallthru
    _
  // Predicated region
  $region18: #{tpu_custom_call.1} parent=0 // pred_check
    _
  $region19: #{tpu_custom_call.1} parent=0 // pred_check_branch
    %19 = sbr.rel (0) target = $region21
  $region20: #{tpu_custom_call.1} parent=0 // pred_region
    _
  $region21: #{tpu_custom_call.1} parent=0 // pred_fallthru
    _
  %v21 = vld [vmem:[%s1] sm:$0xf]
  %v22 = vld [vmem:[%s1 + $0x4] sm:$0xf]
  %v23 = vld [vmem:[%s1 + $0x8] sm:$0xf]
  %v24 = vld [vmem:[%s1 + $0xc] sm:$0xf]
  %v25 = vld [vmem:[%s1 + $0x10] sm:$0xf]
  %v26 = vld [vmem:[%s1 + $0x14] sm:$0xf]
  %v27 = vld [vmem:[%s1 + $0x18] sm:$0xf]
  %v28 = vld [vmem:[%s1 + $0x1c] sm:$0xf]
  %v29 = vld [vmem:[%s1 + $0x20] sm:$0xf]
  %v30 = vld [vmem:[%s1 + $0x24] sm:$0xf]
  %v31 = vld [vmem:[%s1 + $0x28] sm:$0xf]
  %v32 = vld [vmem:[%s1 + $0x2c] sm:$0xf]
  %v33 = vld [vmem:[%s1 + $0x30] sm:$0xf]
  %v34 = vld [vmem:[%s1 + $0x34] sm:$0xf]
  %v35 = vld [vmem:[%s1 + $0x38] sm:$0xf]
  %v36 = vld [vmem:[%s1 + $0x3c] sm:$0xf]
  %v37 = vld [vmem:[%s0] sm:$0xff]
  %v38 = vld [vmem:[%s0 + $0x8] sm:$0xff]
  %v39 = vld [vmem:[%s0 + $0x10] sm:$0xff]
  %v40 = vld [vmem:[%s0 + $0x18] sm:$0xff]
  %v41 = vld [vmem:[%s0 + $0x20] sm:$0xff]
  %v42 = vld [vmem:[%s0 + $0x28] sm:$0xff]
  %v43 = vld [vmem:[%s0 + $0x30] sm:$0xff]
  %v44 = vld [vmem:[%s0 + $0x38] sm:$0xff]
  %v45 = vld [vmem:[%s0 + $0x40] sm:$0xff]
  %v46 = vld [vmem:[%s0 + $0x48] sm:$0xff]
  %v47 = vld [vmem:[%s0 + $0x50] sm:$0xff]
  %v48 = vld [vmem:[%s0 + $0x58] sm:$0xff]
  %v49 = vld [vmem:[%s0 + $0x60] sm:$0xff]
  %v50 = vld [vmem:[%s0 + $0x68] sm:$0xff]
  %v51 = vld [vmem:[%s0 + $0x70] sm:$0xff]
  %v52 = vld [vmem:[%s0 + $0x78] sm:$0xff]
  %v53 = vld [vmem:[%s2] sm:$0xff]
  %v54 = vld [vmem:[%s2 + $0x8] sm:$0xff]
  %v55 = vld [vmem:[%s2 + $0x10] sm:$0xff]
  %v56 = vld [vmem:[%s2 + $0x18] sm:$0xff]
  %v73 = vunpack.c.l.b16 %v21
  %v74 = vunpack.c.l.b16 %v22
  %v75 = vunpack.c.l.b16 %v23
  %v76 = vunpack.c.l.b16 %v24
  %v77 = vunpack.c.l.b16 %v25
  %v78 = vunpack.c.l.b16 %v26
  %v79 = vunpack.c.l.b16 %v27
  %v80 = vunpack.c.l.b16 %v28
  %v81 = vunpack.c.l.b16 %v29
  %v82 = vunpack.c.l.b16 %v30
  %v83 = vunpack.c.l.b16 %v31
  %v84 = vunpack.c.l.b16 %v32
  %v85 = vunpack.c.l.b16 %v33
  %v86 = vunpack.c.l.b16 %v34
  %v87 = vunpack.c.l.b16 %v35
  %v88 = vunpack.c.l.b16 %v36
  %v89 = vpack.c.b16 %v74, %v73
  %v90 = vpack.c.b16 %v76, %v75
  %v91 = vpack.c.b16 %v78, %v77
  %v92 = vpack.c.b16 %v80, %v79
  %v93 = vpack.c.b16 %v82, %v81
  %v94 = vpack.c.b16 %v84, %v83
  %v95 = vpack.c.b16 %v86, %v85
  %v96 = vpack.c.b16 %v88, %v87
  %v101 = vunpack.c.l.b16 %v53
  %v102 = vunpack.c.h.b16 %v53
  %v103 = vunpack.c.l.b16 %v54
  %v104 = vunpack.c.h.b16 %v54
  %v105 = vunpack.c.l.b16 %v55
  %v106 = vunpack.c.h.b16 %v55
  %v107 = vunpack.c.l.b16 %v56
  %v108 = vunpack.c.h.b16 %v56
  %v109 = vpack.c.b16 %v103, %v101
  %v110 = vpack.c.b16 %v104, %v102
  %v111 = vpack.c.b16 %v107, %v105
  %v112 = vpack.c.b16 %v108, %v106
  %vm117 = vcmask 261120
  %v119 = vsel %vm117, %v89, 0
  %v122 = vsel %vm117, %v90, 0
  %v125 = vsel %vm117, %v91, 0
  %v128 = vsel %vm117, %v92, 0
  %v131 = vsel %vm117, %v93, 0
  %v134 = vsel %vm117, %v94, 0
  %v137 = vsel %vm117, %v95, 0
  %v140 = vsel %vm117, %v96, 0
  %142 = vmatprep.subr.bf16.mxu0 %v110
  %143 = vmatpush1.bf16.msra.mxu0 %v109
  %144 = vmatprep.subr.bf16.mxu0 %v112
  %145 = vmatpush1.bf16.msra.mxu0 %v111
  %146 = vmatprep.subr.bf16.mxu0 0
  %147 = vmatpush1.bf16.msra.mxu0 0
  %148 = vmatprep.subr.bf16.mxu0 0
  %149 = vmatpush1.bf16.msra.mxu0 0
  %150 = vmatprep.subr.bf16.mxu0 0
  %151 = vmatpush1.bf16.msra.mxu0 0
  %152 = vmatprep.subr.bf16.mxu0 0
  %153 = vmatpush1.bf16.msra.mxu0 0
  %154 = vmatprep.subr.bf16.mxu0 0
  %155 = vmatpush1.bf16.msra.mxu0 0
  %156 = vmatprep.subr.bf16.mxu0 0
  %157 = vmatpush1.bf16.msra.mxu0 0
  %158 = vmatprep.subr.bf16.mxu0 0
  %159 = vmatpush1.bf16.msra.mxu0 0
  %160 = vmatprep.subr.bf16.mxu0 0
  %161 = vmatpush1.bf16.msra.mxu0 0
  %162 = vmatprep.subr.bf16.mxu0 0
  %163 = vmatpush1.bf16.msra.mxu0 0
  %164 = vmatprep.subr.bf16.mxu0 0
  %165 = vmatpush1.bf16.msra.mxu0 0
  %166 = vmatprep.subr.bf16.mxu0 0
  %167 = vmatpush1.bf16.msra.mxu0 0
  %168 = vmatprep.subr.bf16.mxu0 0
  %169 = vmatpush1.bf16.msra.mxu0 0
  %170 = vmatprep.subr.bf16.mxu0 0
  %171 = vmatpush1.bf16.msra.mxu0 0
  %172 = vmatprep.subr.bf16.mxu0 0
  %173 = vmatpush1.bf16.msra.mxu0 0
  %174 = vmatprep.mubr.bf16.mxu0 0
  %175 = vmatmul.mubr.bf16.gmra.mrb[0].mxu0 %v119
  %v176 = vpop.f32.mrb[0].mxu0
  %v177 = vadd.f32 0.0, %v176
  %v178 = vpop.f32.mrb[0].mxu0
  %v179 = vadd.f32 0.0, %v178
  %v180 = vpop.f32.mrb[0].mxu0
  %v181 = vadd.f32 0.0, %v180
  %v182 = vpop.f32.mrb[0].mxu0
  %v183 = vadd.f32 0.0, %v182
  %184 = vmatprep.mubr.bf16.mxu0 0
  %185 = vmatmul.mubr.bf16.gmra.mrb[0].mxu0 %v122
  %v186 = vpop.f32.mrb[0].mxu0
  %v187 = vadd.f32 0.0, %v186
  %v188 = vpop.f32.mrb[0].mxu0
  %v189 = vadd.f32 0.0, %v188
  %v190 = vpop.f32.mrb[0].mxu0
  %v191 = vadd.f32 0.0, %v190
  %v192 = vpop.f32.mrb[0].mxu0
  %v193 = vadd.f32 0.0, %v192
  %194 = vmatprep.mubr.bf16.mxu0 0
  %195 = vmatmul.mubr.bf16.gmra.mrb[0].mxu0 %v125
  %v196 = vpop.f32.mrb[0].mxu0
  %v197 = vadd.f32 0.0, %v196
  %v198 = vpop.f32.mrb[0].mxu0
  %v199 = vadd.f32 0.0, %v198
  %v200 = vpop.f32.mrb[0].mxu0
  %v201 = vadd.f32 0.0, %v200
  %v202 = vpop.f32.mrb[0].mxu0
  %v203 = vadd.f32 0.0, %v202
  %204 = vmatprep.mubr.bf16.mxu0 0
  %205 = vmatmul.mubr.bf16.gmra.mrb[0].mxu0 %v128
  %v206 = vpop.f32.mrb[0].mxu0
  %v207 = vadd.f32 0.0, %v206
  %v208 = vpop.f32.mrb[0].mxu0
  %v209 = vadd.f32 0.0, %v208
  %v210 = vpop.f32.mrb[0].mxu0
  %v211 = vadd.f32 0.0, %v210
  %v212 = vpop.f32.mrb[0].mxu0
  %v213 = vadd.f32 0.0, %v212
  %214 = vmatprep.mubr.bf16.mxu0 0
  %215 = vmatmul.mubr.bf16.gmra.mrb[0].mxu0 %v131
  %v216 = vpop.f32.mrb[0].mxu0
  %v217 = vadd.f32 0.0, %v216
  %v218 = vpop.f32.mrb[0].mxu0
  %v219 = vadd.f32 0.0, %v218
  %v220 = vpop.f32.mrb[0].mxu0
  %v221 = vadd.f32 0.0, %v220
  %v222 = vpop.f32.mrb[0].mxu0
  %v223 = vadd.f32 0.0, %v222
  %224 = vmatprep.mubr.bf16.mxu0 0
  %225 = vmatmul.mubr.bf16.gmra.mrb[0].mxu0 %v134
  %v226 = vpop.f32.mrb[0].mxu0
  %v227 = vadd.f32 0.0, %v226
  %v228 = vpop.f32.mrb[0].mxu0
  %v229 = vadd.f32 0.0, %v228
  %v230 = vpop.f32.mrb[0].mxu0
  %v231 = vadd.f32 0.0, %v230
  %v232 = vpop.f32.mrb[0].mxu0
  %v233 = vadd.f32 0.0, %v232
  %234 = vmatprep.mubr.bf16.mxu0 0
  %235 = vmatmul.mubr.bf16.gmra.mrb[0].mxu0 %v137
  %v236 = vpop.f32.mrb[0].mxu0
  %v237 = vadd.f32 0.0, %v236
  %v238 = vpop.f32.mrb[0].mxu0
  %v239 = vadd.f32 0.0, %v238
  %v240 = vpop.f32.mrb[0].mxu0
  %v241 = vadd.f32 0.0, %v240
  %v242 = vpop.f32.mrb[0].mxu0
  %v243 = vadd.f32 0.0, %v242
  %244 = vmatprep.mubr.bf16.mxu0 0
  %245 = vmatmul.mubr.bf16.gmra.mrb[0].mxu0 %v140
  %v246 = vpop.f32.mrb[0].mxu0
  %v247 = vadd.f32 0.0, %v246
  %v248 = vpop.f32.mrb[0].mxu0
  %v249 = vadd.f32 0.0, %v248
  %v250 = vpop.f32.mrb[0].mxu0
  %v251 = vadd.f32 0.0, %v250
  %v252 = vpop.f32.mrb[0].mxu0
  %v253 = vadd.f32 0.0, %v252
  %254 = vdwg.mxu0
  %v255 = vld [vmem:[%s3] sm:$0x3]
  %256 = vset.pattern.permute.xlu0 0
  %257 = vperm.xlu0 %256, %v37
  %v258 = vpop.permute.xlu0 %257
  %259 = vset.pattern.permute.xlu0 0
  %260 = vperm.xlu0 %259, %v38
  %v261 = vpop.permute.xlu0 %260
  %262 = vset.pattern.permute.xlu0 0
  %263 = vperm.xlu0 %262, %v39
  %v264 = vpop.permute.xlu0 %263
  %265 = vset.pattern.permute.xlu0 0
  %266 = vperm.xlu0 %265, %v40
  %v267 = vpop.permute.xlu0 %266
  %268 = vset.pattern.permute.xlu0 0
  %269 = vperm.xlu0 %268, %v41
  %v270 = vpop.permute.xlu0 %269
  %271 = vset.pattern.permute.xlu0 0
  %272 = vperm.xlu0 %271, %v42
  %v273 = vpop.permute.xlu0 %272
  %274 = vset.pattern.permute.xlu0 0
  %275 = vperm.xlu0 %274, %v43
  %v276 = vpop.permute.xlu0 %275
  %277 = vset.pattern.permute.xlu0 0
  %278 = vperm.xlu0 %277, %v44
  %v279 = vpop.permute.xlu0 %278
  %280 = vset.pattern.permute.xlu0 0
  %281 = vperm.xlu0 %280, %v45
  %v282 = vpop.permute.xlu0 %281
  %283 = vset.pattern.permute.xlu0 0
  %284 = vperm.xlu0 %283, %v46
  %v285 = vpop.permute.xlu0 %284
  %286 = vset.pattern.permute.xlu0 0
  %287 = vperm.xlu0 %286, %v47
  %v288 = vpop.permute.xlu0 %287
  %289 = vset.pattern.permute.xlu0 0
  %290 = vperm.xlu0 %289, %v48
  %v291 = vpop.permute.xlu0 %290
  %292 = vset.pattern.permute.xlu0 0
  %293 = vperm.xlu0 %292, %v49
  %v294 = vpop.permute.xlu0 %293
  %295 = vset.pattern.permute.xlu0 0
  %296 = vperm.xlu0 %295, %v50
  %v297 = vpop.permute.xlu0 %296
  %298 = vset.pattern.permute.xlu0 0
  %299 = vperm.xlu0 %298, %v51
  %v300 = vpop.permute.xlu0 %299
  %301 = vset.pattern.permute.xlu0 0
  %302 = vperm.xlu0 %301, %v52
  %v303 = vpop.permute.xlu0 %302
  %v304 = vlaneseq
  %v305 = vshrl.u32 %v304, 7
  %v306 = vsub.s32 0, %v305
  %v307 = vrot.slane %v255, %v306
  %v308 = vlaneseq
  %v309 = vshrl.u32 %v308, 7
  %v310 = vsub.s32 1, %v309
  %v311 = vrot.slane %v255, %v310
  %vm312 = vcmp.eq.s32.totalorder %v258, %v307
  %vm313 = vcmp.eq.s32.totalorder %v258, %v311
  %vm314 = vcmp.eq.s32.totalorder %v261, %v307
  %vm315 = vcmp.eq.s32.totalorder %v261, %v311
  %vm316 = vcmp.eq.s32.totalorder %v264, %v307
  %vm317 = vcmp.eq.s32.totalorder %v264, %v311
  %vm318 = vcmp.eq.s32.totalorder %v267, %v307
  %vm319 = vcmp.eq.s32.totalorder %v267, %v311
  %vm320 = vcmp.eq.s32.totalorder %v270, %v307
  %vm321 = vcmp.eq.s32.totalorder %v270, %v311
  %vm322 = vcmp.eq.s32.totalorder %v273, %v307
  %vm323 = vcmp.eq.s32.totalorder %v273, %v311
  %vm324 = vcmp.eq.s32.totalorder %v276, %v307
  %vm325 = vcmp.eq.s32.totalorder %v276, %v311
  %vm326 = vcmp.eq.s32.totalorder %v279, %v307
  %vm327 = vcmp.eq.s32.totalorder %v279, %v311
  %vm328 = vcmp.eq.s32.totalorder %v282, %v307
  %vm329 = vcmp.eq.s32.totalorder %v282, %v311
  %vm330 = vcmp.eq.s32.totalorder %v285, %v307
  %vm331 = vcmp.eq.s32.totalorder %v285, %v311
  %vm332 = vcmp.eq.s32.totalorder %v288, %v307
  %vm333 = vcmp.eq.s32.totalorder %v288, %v311
  %vm334 = vcmp.eq.s32.totalorder %v291, %v307
  %vm335 = vcmp.eq.s32.totalorder %v291, %v311
  %vm336 = vcmp.eq.s32.totalorder %v294, %v307
  %vm337 = vcmp.eq.s32.totalorder %v294, %v311
  %vm338 = vcmp.eq.s32.totalorder %v297, %v307
  %vm339 = vcmp.eq.s32.totalorder %v297, %v311
  %vm340 = vcmp.eq.s32.totalorder %v300, %v307
  %vm341 = vcmp.eq.s32.totalorder %v300, %v311
  %vm342 = vcmp.eq.s32.totalorder %v303, %v307
  %vm343 = vcmp.eq.s32.totalorder %v303, %v311
  %v344 = vsel %vm312, %v177, 0.0
  %v345 = vsel %vm313, %v179, 0.0
  %v346 = vsel %vm314, %v181, 0.0
  %v347 = vsel %vm315, %v183, 0.0
  %v348 = vsel %vm316, %v187, 0.0
  %v349 = vsel %vm317, %v189, 0.0
  %v350 = vsel %vm318, %v191, 0.0
  %v351 = vsel %vm319, %v193, 0.0
  %v352 = vsel %vm320, %v197, 0.0
  %v353 = vsel %vm321, %v199, 0.0
  %v354 = vsel %vm322, %v201, 0.0
  %v355 = vsel %vm323, %v203, 0.0
  %v356 = vsel %vm324, %v207, 0.0
  %v357 = vsel %vm325, %v209, 0.0
  %v358 = vsel %vm326, %v211, 0.0
  %v359 = vsel %vm327, %v213, 0.0
  %v360 = vsel %vm328, %v217, 0.0
  %v361 = vsel %vm329, %v219, 0.0
  %v362 = vsel %vm330, %v221, 0.0
  %v363 = vsel %vm331, %v223, 0.0
  %v364 = vsel %vm332, %v227, 0.0
  %v365 = vsel %vm333, %v229, 0.0
  %v366 = vsel %vm334, %v231, 0.0
  %v367 = vsel %vm335, %v233, 0.0
  %v368 = vsel %vm336, %v237, 0.0
  %v369 = vsel %vm337, %v239, 0.0
  %v370 = vsel %vm338, %v241, 0.0
  %v371 = vsel %vm339, %v243, 0.0
  %v372 = vsel %vm340, %v247, 0.0
  %v373 = vsel %vm341, %v249, 0.0
  %v374 = vsel %vm342, %v251, 0.0
  %v375 = vsel %vm343, %v253, 0.0
  %v376 = vpack.c.bf16 %v346, %v344
  %v377 = vpack.c.bf16 %v347, %v345
  %v378 = vpack.c.bf16 %v350, %v348
  %v379 = vpack.c.bf16 %v351, %v349
  %v380 = vpack.c.bf16 %v354, %v352
  %v381 = vpack.c.bf16 %v355, %v353
  %v382 = vpack.c.bf16 %v358, %v356
  %v383 = vpack.c.bf16 %v359, %v357
  %v384 = vpack.c.bf16 %v362, %v360
  %v385 = vpack.c.bf16 %v363, %v361
  %v386 = vpack.c.bf16 %v366, %v364
  %v387 = vpack.c.bf16 %v367, %v365
  %v388 = vpack.c.bf16 %v370, %v368
  %v389 = vpack.c.bf16 %v371, %v369
  %v390 = vpack.c.bf16 %v374, %v372
  %v391 = vpack.c.bf16 %v375, %v373
  %v392 = vld [vmem:[%s4] sm:$0xf]
  %v393 = vld [vmem:[%s4 + $0x4] sm:$0xf]
  %v394 = vld [vmem:[%s4 + $0x8] sm:$0xf]
  %v395 = vld [vmem:[%s4 + $0xc] sm:$0xf]
  %v396 = vld [vmem:[%s4 + $0x10] sm:$0xf]
  %v397 = vld [vmem:[%s4 + $0x14] sm:$0xf]
  %v398 = vld [vmem:[%s4 + $0x18] sm:$0xf]
  %v399 = vld [vmem:[%s4 + $0x1c] sm:$0xf]
  %v400 = vld [vmem:[%s4 + $0x20] sm:$0xf]
  %v401 = vld [vmem:[%s4 + $0x24] sm:$0xf]
  %v402 = vld [vmem:[%s4 + $0x28] sm:$0xf]
  %v403 = vld [vmem:[%s4 + $0x2c] sm:$0xf]
  %v404 = vld [vmem:[%s4 + $0x30] sm:$0xf]
  %v405 = vld [vmem:[%s4 + $0x34] sm:$0xf]
  %v406 = vld [vmem:[%s4 + $0x38] sm:$0xf]
  %v407 = vld [vmem:[%s4 + $0x3c] sm:$0xf]
  %v408 = vld [vmem:[%s4 + $0x40] sm:$0xf]
  %v409 = vld [vmem:[%s4 + $0x44] sm:$0xf]
  %v410 = vld [vmem:[%s4 + $0x48] sm:$0xf]
  %v411 = vld [vmem:[%s4 + $0x4c] sm:$0xf]
  %v412 = vld [vmem:[%s4 + $0x50] sm:$0xf]
  %v413 = vld [vmem:[%s4 + $0x54] sm:$0xf]
  %v414 = vld [vmem:[%s4 + $0x58] sm:$0xf]
  %v415 = vld [vmem:[%s4 + $0x5c] sm:$0xf]
  %v416 = vld [vmem:[%s4 + $0x60] sm:$0xf]
  %v417 = vld [vmem:[%s4 + $0x64] sm:$0xf]
  %v418 = vld [vmem:[%s4 + $0x68] sm:$0xf]
  %v419 = vld [vmem:[%s4 + $0x6c] sm:$0xf]
  %v420 = vld [vmem:[%s4 + $0x70] sm:$0xf]
  %v421 = vld [vmem:[%s4 + $0x74] sm:$0xf]
  %v422 = vld [vmem:[%s4 + $0x78] sm:$0xf]
  %v423 = vld [vmem:[%s4 + $0x7c] sm:$0xf]
  %v456 = vunpack.c.l.b16 %v392
  %v457 = vunpack.c.l.b16 %v393
  %v458 = vunpack.c.l.b16 %v394
  %v459 = vunpack.c.l.b16 %v395
  %v460 = vunpack.c.l.b16 %v396
  %v461 = vunpack.c.l.b16 %v397
  %v462 = vunpack.c.l.b16 %v398
  %v463 = vunpack.c.l.b16 %v399
  %v464 = vunpack.c.l.b16 %v400
  %v465 = vunpack.c.l.b16 %v401
  %v466 = vunpack.c.l.b16 %v402
  %v467 = vunpack.c.l.b16 %v403
  %v468 = vunpack.c.l.b16 %v404
  %v469 = vunpack.c.l.b16 %v405
  %v470 = vunpack.c.l.b16 %v406
  %v471 = vunpack.c.l.b16 %v407
  %v472 = vunpack.c.l.b16 %v408
  %v473 = vunpack.c.l.b16 %v409
  %v474 = vunpack.c.l.b16 %v410
  %v475 = vunpack.c.l.b16 %v411
  %v476 = vunpack.c.l.b16 %v412
  %v477 = vunpack.c.l.b16 %v413
  %v478 = vunpack.c.l.b16 %v414
  %v479 = vunpack.c.l.b16 %v415
  %v480 = vunpack.c.l.b16 %v416
  %v481 = vunpack.c.l.b16 %v417
  %v482 = vunpack.c.l.b16 %v418
  %v483 = vunpack.c.l.b16 %v419
  %v484 = vunpack.c.l.b16 %v420
  %v485 = vunpack.c.l.b16 %v421
  %v486 = vunpack.c.l.b16 %v422
  %v487 = vunpack.c.l.b16 %v423
  %v488 = vpack.c.b16 %v457, %v456
  %v489 = vpack.c.b16 %v459, %v458
  %v490 = vpack.c.b16 %v461, %v460
  %v491 = vpack.c.b16 %v463, %v462
  %v492 = vpack.c.b16 %v465, %v464
  %v493 = vpack.c.b16 %v467, %v466
  %v494 = vpack.c.b16 %v469, %v468
  %v495 = vpack.c.b16 %v471, %v470
  %v496 = vpack.c.b16 %v473, %v472
  %v497 = vpack.c.b16 %v475, %v474
  %v498 = vpack.c.b16 %v477, %v476
  %v499 = vpack.c.b16 %v479, %v478
  %v500 = vpack.c.b16 %v481, %v480
  %v501 = vpack.c.b16 %v483, %v482
  %v502 = vpack.c.b16 %v485, %v484
  %v503 = vpack.c.b16 %v487, %v486
  %520 = vmatprep.subr.bf16.mxu0 0
  %521 = vmatpush1.bf16.msra.mxu0 %v488
  %522 = vmatprep.subr.bf16.mxu0 0
  %523 = vmatpush1.bf16.msra.mxu0 %v489
  %524 = vmatprep.subr.bf16.mxu0 0
  %525 = vmatpush1.bf16.msra.mxu0 %v490
  %526 = vmatprep.subr.bf16.mxu0 0
  %527 = vmatpush1.bf16.msra.mxu0 %v491
  %528 = vmatprep.subr.bf16.mxu0 0
  %529 = vmatpush1.bf16.msra.mxu0 %v492
  %530 = vmatprep.subr.bf16.mxu0 0
  %531 = vmatpush1.bf16.msra.mxu0 %v493
  %532 = vmatprep.subr.bf16.mxu0 0
  %533 = vmatpush1.bf16.msra.mxu0 %v494
  %534 = vmatprep.subr.bf16.mxu0 0
  %535 = vmatpush1.bf16.msra.mxu0 %v495
  %536 = vmatprep.subr.bf16.mxu0 0
  %537 = vmatpush1.bf16.msra.mxu0 %v496
  %538 = vmatprep.subr.bf16.mxu0 0
  %539 = vmatpush1.bf16.msra.mxu0 %v497
  %540 = vmatprep.subr.bf16.mxu0 0
  %541 = vmatpush1.bf16.msra.mxu0 %v498
  %542 = vmatprep.subr.bf16.mxu0 0
  %543 = vmatpush1.bf16.msra.mxu0 %v499
  %544 = vmatprep.subr.bf16.mxu0 0
  %545 = vmatpush1.bf16.msra.mxu0 %v500
  %546 = vmatprep.subr.bf16.mxu0 0
  %547 = vmatpush1.bf16.msra.mxu0 %v501
  %548 = vmatprep.subr.bf16.mxu0 0
  %549 = vmatpush1.bf16.msra.mxu0 %v502
  %550 = vmatprep.subr.bf16.mxu0 0
  %551 = vmatpush1.bf16.msra.mxu0 %v503
  %552 = vmatprep.mubr.bf16.mxu0 %v377
  %553 = vmatmul.mubr.bf16.gmra.mrb[0].mxu0 %v376
  %v554 = vpop.f32.mrb[0].mxu0
  %v555 = vadd.f32 0.0, %v554
  %v556 = vpop.f32.mrb[0].mxu0
  %v557 = vpop.f32.mrb[0].mxu0
  %v558 = vadd.f32 0.0, %v557
  %v559 = vpop.f32.mrb[0].mxu0
  %560 = vmatprep.mubr.bf16.mxu0 %v379
  %561 = vmatmul.mubr.bf16.gmra.mrb[0].mxu0 %v378
  %v562 = vpop.f32.mrb[0].mxu0
  %v563 = vadd.f32 0.0, %v562
  %v564 = vpop.f32.mrb[0].mxu0
  %v565 = vpop.f32.mrb[0].mxu0
  %v566 = vadd.f32 0.0, %v565
  %v567 = vpop.f32.mrb[0].mxu0
  %568 = vmatprep.mubr.bf16.mxu0 %v381
  %569 = vmatmul.mubr.bf16.gmra.mrb[0].mxu0 %v380
  %v570 = vpop.f32.mrb[0].mxu0
  %v571 = vadd.f32 0.0, %v570
  %v572 = vpop.f32.mrb[0].mxu0
  %v573 = vpop.f32.mrb[0].mxu0
  %v574 = vadd.f32 0.0, %v573
  %v575 = vpop.f32.mrb[0].mxu0
  %576 = vmatprep.mubr.bf16.mxu0 %v383
  %577 = vmatmul.mubr.bf16.gmra.mrb[0].mxu0 %v382
  %v578 = vpop.f32.mrb[0].mxu0
  %v579 = vadd.f32 0.0, %v578
  %v580 = vpop.f32.mrb[0].mxu0
  %v581 = vpop.f32.mrb[0].mxu0
  %v582 = vadd.f32 0.0, %v581
  %v583 = vpop.f32.mrb[0].mxu0
  %584 = vmatprep.mubr.bf16.mxu0 %v385
  %585 = vmatmul.mubr.bf16.gmra.mrb[0].mxu0 %v384
  %v586 = vpop.f32.mrb[0].mxu0
  %v587 = vadd.f32 0.0, %v586
  %v588 = vpop.f32.mrb[0].mxu0
  %v589 = vpop.f32.mrb[0].mxu0
  %v590 = vadd.f32 0.0, %v589
  %v591 = vpop.f32.mrb[0].mxu0
  %592 = vmatprep.mubr.bf16.mxu0 %v387
  %593 = vmatmul.mubr.bf16.gmra.mrb[0].mxu0 %v386
  %v594 = vpop.f32.mrb[0].mxu0
  %v595 = vadd.f32 0.0, %v594
  %v596 = vpop.f32.mrb[0].mxu0
  %v597 = vpop.f32.mrb[0].mxu0
  %v598 = vadd.f32 0.0, %v597
  %v599 = vpop.f32.mrb[0].mxu0
  %600 = vmatprep.mubr.bf16.mxu0 %v389
  %601 = vmatmul.mubr.bf16.gmra.mrb[0].mxu0 %v388
  %v602 = vpop.f32.mrb[0].mxu0
  %v603 = vadd.f32 0.0, %v602
  %v604 = vpop.f32.mrb[0].mxu0
  %v605 = vpop.f32.mrb[0].mxu0
  %v606 = vadd.f32 0.0, %v605
  %v607 = vpop.f32.mrb[0].mxu0
  %608 = vmatprep.mubr.bf16.mxu0 %v391
  %609 = vmatmul.mubr.bf16.gmra.mrb[0].mxu0 %v390
  %v610 = vpop.f32.mrb[0].mxu0
  %v611 = vadd.f32 0.0, %v610
  %v612 = vpop.f32.mrb[0].mxu0
  %v613 = vpop.f32.mrb[0].mxu0
  %v614 = vadd.f32 0.0, %v613
  %v615 = vpop.f32.mrb[0].mxu0
  %616 = vdwg.mxu0
  %v617 = vmax.f32 %v555, 0.0
  %v618 = vmax.f32 %v558, 0.0
  %v619 = vmax.f32 %v563, 0.0
  %v620 = vmax.f32 %v566, 0.0
  %v621 = vmax.f32 %v571, 0.0
  %v622 = vmax.f32 %v574, 0.0
  %v623 = vmax.f32 %v579, 0.0
  %v624 = vmax.f32 %v582, 0.0
  %v625 = vmax.f32 %v587, 0.0
  %v626 = vmax.f32 %v590, 0.0
  %v627 = vmax.f32 %v595, 0.0
  %v628 = vmax.f32 %v598, 0.0
  %v629 = vmax.f32 %v603, 0.0
  %v630 = vmax.f32 %v606, 0.0
  %v631 = vmax.f32 %v611, 0.0
  %v632 = vmax.f32 %v614, 0.0
  %633 = vst.msk [vmem:[%s5] sm:$0xff] %vm117, %v617
  %634 = vst.msk [vmem:[%s5 + $0x8] sm:$0xff] %vm117, %v618
  %635 = vst.msk [vmem:[%s5 + $0x10] sm:$0xff] %vm117, %v619
  %636 = vst.msk [vmem:[%s5 + $0x18] sm:$0xff] %vm117, %v620
  %637 = vst.msk [vmem:[%s5 + $0x20] sm:$0xff] %vm117, %v621
  %638 = vst.msk [vmem:[%s5 + $0x28] sm:$0xff] %vm117, %v622
  %639 = vst.msk [vmem:[%s5 + $0x30] sm:$0xff] %vm117, %v623
  %640 = vst.msk [vmem:[%s5 + $0x38] sm:$0xff] %vm117, %v624
  %641 = vst.msk [vmem:[%s5 + $0x40] sm:$0xff] %vm117, %v625
  %642 = vst.msk [vmem:[%s5 + $0x48] sm:$0xff] %vm117, %v626
  %643 = vst.msk [vmem:[%s5 + $0x50] sm:$0xff] %vm117, %v627
  %644 = vst.msk [vmem:[%s5 + $0x58] sm:$0xff] %vm117, %v628
  %645 = vst.msk [vmem:[%s5 + $0x60] sm:$0xff] %vm117, %v629
  %646 = vst.msk [vmem:[%s5 + $0x68] sm:$0xff] %vm117, %v630
  %647 = vst.msk [vmem:[%s5 + $0x70] sm:$0xff] %vm117, %v631
  %648 = vst.msk [vmem:[%s5 + $0x78] sm:$0xff] %vm117, %v632
  // Predicated region
  $region22: #{tpu_custom_call.1} parent=0 // pred_check
    _
  $region23: #{tpu_custom_call.1} parent=0 // pred_check_branch
    %650 = sbr.rel (0) target = $region25
  $region24: #{tpu_custom_call.1} parent=0 // pred_region
    _
  $region25: #{tpu_custom_call.1} parent=0 // pred_fallthru
    _
  // Predicated region
  $region26: #{tpu_custom_call.1} parent=0 // pred_check
    _
  $region27: #{tpu_custom_call.1} parent=0 // pred_check_branch
    %652 = sbr.rel (0) target = $region29
  $region28: #{tpu_custom_call.1} parent=0 // pred_region
    _
  $region29: #{tpu_custom_call.1} parent=0 // pred_fallthru
    _

</llo_original>
